<compile_context>
chip_gen: v5e
topology: v5e:2x2
jax: 0.10.0
libtpu: 0.0.40
codegen_flags: <defaults>
</compile_context>

<pallas_src>
import functools

import jax
import jax.numpy as jnp
from jax.experimental import pallas as pl
from jax.experimental.pallas import tpu as pltpu


def _round_up(x, m):
    return (x + m - 1) // m * m


def _linear_kernel(x_ref, w_ref, b_ref, o_ref, acc_ref):
    # x_ref: [TM, TK] (VMEM), w_ref: [1, TK] (VMEM, lane-dense row),
    # b_ref: [1] (SMEM scalar), o_ref: [TM, 1], acc_ref: [TM, 1] f32 scratch.
    k = pl.program_id(1)

    @pl.when(k == 0)
    def _():
        acc_ref[...] = jnp.zeros_like(acc_ref)

    # VPU multiply (w row broadcasts over sublanes) + XLU row reduce,
    # accumulated in f32.
    x = x_ref[...].astype(jnp.float32)
    w = w_ref[...].astype(jnp.float32)
    acc_ref[...] += jnp.sum(x * w, axis=-1, keepdims=True)

    @pl.when(k == pl.num_programs(1) - 1)
    def _():
        o_ref[...] = (acc_ref[...] + b_ref[0]).astype(o_ref.dtype)


@functools.partial(jax.jit, static_argnames=("tm", "tk"))
def cnn_forward(x, w, b, *, tm=512, tk=2048):
    """Forward pass of CNN: flatten + Linear(F, 1).

    x: [N, C, H, W]; w: [1, F] (PyTorch Linear weight layout); b: [1].
    Returns [N, 1].
    """
    n = x.shape[0]
    x_flat = x.reshape(n, -1)          # glue: flatten (a view in PyTorch)
    f = x_flat.shape[1]
    out_dtype = x.dtype

    # Effective tile sizes: respect the (8, 128) min tile, never exceed the
    # (padded) problem size.
    tm_eff = min(tm, _round_up(n, 8))
    tk_eff = min(tk, _round_up(f, 128))
    n_pad = _round_up(n, tm_eff)
    f_pad = _round_up(f, tk_eff)

    if (n_pad, f_pad) != (n, f):
        x_flat = jnp.pad(x_flat, ((0, n_pad - n), (0, f_pad - f)))
    w_row = w.reshape(1, f).astype(x_flat.dtype)   # lane-dense weight row
    if f_pad != f:
        w_row = jnp.pad(w_row, ((0, 0), (0, f_pad - f)))
    b_vec = b.reshape(1).astype(jnp.float32)       # SMEM scalar

    grid = (n_pad // tm_eff, f_pad // tk_eff)

    cost = pl.CostEstimate(
        flops=2 * n * f,
        transcendentals=0,
        bytes_accessed=4 * (n * f + f + n),
    )

    out = pl.pallas_call(
        _linear_kernel,
        out_shape=jax.ShapeDtypeStruct((n_pad, 1), out_dtype),
        grid_spec=pltpu.PrefetchScalarGridSpec(
            num_scalar_prefetch=0,
            grid=grid,
            in_specs=[
                pl.BlockSpec((tm_eff, tk_eff), lambda i, k: (i, k)),
                pl.BlockSpec((1, tk_eff), lambda i, k: (0, k)),
                pl.BlockSpec(memory_space=pltpu.MemorySpace.SMEM),
            ],
            out_specs=pl.BlockSpec((tm_eff, 1), lambda i, k: (i, 0)),
            scratch_shapes=[pltpu.VMEM((tm_eff, 1), jnp.float32)],
        ),
        compiler_params=pltpu.CompilerParams(
            dimension_semantics=("parallel", "arbitrary"),
        ),
        cost_estimate=cost,
    )(x_flat, w_row, b_vec)

    return out[:n]


def init_params(key, in_features, out_features=1, dtype=jnp.float32):
    # Deterministic init mirroring torch.nn.Linear default:
    # U(-1/sqrt(in_features), 1/sqrt(in_features)) for both weight and bias.
    kw, kb = jax.random.split(key)
    bound = 1.0 / jnp.sqrt(jnp.float32(in_features))
    w = jax.random.uniform(kw, (out_features, in_features), dtype,
                           minval=-bound, maxval=bound)
    b = jax.random.uniform(kb, (out_features,), dtype,
                           minval=-bound, maxval=bound)
    return w, b


if __name__ == "__main__":
    key = jax.random.PRNGKey(0)
    k_x, k_p, k_x2, k_p2 = jax.random.split(key, 4)

    # Primary small test: batch=2, channels=1, width=height=16 -> F=256.
    N, C, H, W = 2, 1, 16, 16
    x = jax.random.normal(k_x, (N, C, H, W), dtype=jnp.float32)
    w, b = init_params(k_p, in_features=C * H * W, out_features=1)

    out = cnn_forward(x, w, b)
    out = jax.block_until_ready(out)

    ref = x.reshape(N, -1) @ w.T + b
    assert out.shape == (N, 1), out.shape
    assert jnp.allclose(out, ref, atol=1e-5, rtol=1e-5), (out, ref)

    # Secondary check exercising the tiled/padded path (multi-k reduction and
    # non-multiple-of-tile N and F).
    N2, C2, H2, W2 = 17, 1, 64, 40          # F = 2560 -> padded to 4096, 2 k-steps
    x2 = jax.random.normal(k_x2, (N2, C2, H2, W2), dtype=jnp.float32)
    w2, b2 = init_params(k_p2, in_features=C2 * H2 * W2, out_features=1)
    out2 = jax.block_until_ready(cnn_forward(x2, w2, b2))
    ref2 = x2.reshape(N2, -1) @ w2.T + b2
    assert out2.shape == (N2, 1), out2.shape
    assert jnp.allclose(out2, ref2, atol=1e-4, rtol=1e-5)

    print("KERNEL_OK")
</pallas_src>

<mosaic_0001>
module attributes {stable_mosaic.version = 11 : i64} {
  func.func @_linear_kernel(%arg0: i32, %arg1: i32, %arg2: memref<8x256xf32, #tpu.memory_space<vmem>>, %arg3: memref<1x256xf32, #tpu.memory_space<vmem>>, %arg4: memref<1xf32, #tpu.memory_space<smem>>, %arg5: memref<8x1xf32, #tpu.memory_space<vmem>>, %arg6: memref<8x1xf32, #tpu.memory_space<vmem>>) attributes {dimension_semantics = [#tpu.dimension_semantics<parallel>, #tpu.dimension_semantics<arbitrary>], iteration_bounds = array<i64: 1, 1>, scalar_prefetch = 0 : i64, scratch_operands = 1 : i64, tpu.core_type = #tpu.core_type<tc>, window_params = [{transform_indices = @transform_0, window_bounds = array<i64: 8, 256>}, {transform_indices = @transform_1, window_bounds = array<i64: 1, 256>}, {transform_indices = @transform_2, window_bounds = array<i64: 1>}, {transform_indices = @transform_3, window_bounds = array<i64: 8, 1>}]} {
    %c0_i32 = arith.constant 0 : i32
    %0 = arith.cmpi eq, %arg1, %c0_i32 : i32
    %1 = arith.extui %0 : i1 to i32
    %c0_i32_0 = arith.constant 0 : i32
    %2 = arith.cmpi ne, %1, %c0_i32_0 : i32
    scf.if %2 {
      %cst_10 = arith.constant 0.000000e+00 : f32
      %15 = vector.broadcast %cst_10 : f32 to vector<8x1xf32>
      %c0_11 = arith.constant 0 : index
      %c0_12 = arith.constant 0 : index
      %16 = vector.load %arg6[%c0_11, %c0_12] : memref<8x1xf32, #tpu.memory_space<vmem>>, vector<8x1xf32>
      tpu.vector_store %arg6[%c0_11, %c0_12], %15 {strides = array<i32>} : memref<8x1xf32, #tpu.memory_space<vmem>>, vector<8x1xf32>,
    } else {
    }
    %c0 = arith.constant 0 : index
    %c0_1 = arith.constant 0 : index
    %3 = vector.load %arg2[%c0, %c0_1] : memref<8x256xf32, #tpu.memory_space<vmem>>, vector<8x256xf32>
    %c0_2 = arith.constant 0 : index
    %c0_3 = arith.constant 0 : index
    %4 = vector.load %arg3[%c0_2, %c0_3] : memref<1x256xf32, #tpu.memory_space<vmem>>, vector<1x256xf32>
    %c0_4 = arith.constant 0 : index
    %c0_5 = arith.constant 0 : index
    %5 = vector.load %arg6[%c0_4, %c0_5] : memref<8x1xf32, #tpu.memory_space<vmem>>, vector<8x1xf32>
    %6 = vector.broadcast %4 : vector<1x256xf32> to vector<8x256xf32>
    %7 = arith.mulf %3, %6 : vector<8x256xf32>
    %cst = arith.constant dense<0.000000e+00> : vector<8xf32>
    %8 = vector.multi_reduction <add>, %7, %cst [1] : vector<8x256xf32> to vector<8xf32>
    %9 = vector.shape_cast %8 : vector<8xf32> to vector<8x1xf32>
    %10 = arith.addf %5, %9 : vector<8x1xf32>
    %c0_6 = arith.constant 0 : index
    %c0_7 = arith.constant 0 : index
    %11 = vector.load %arg6[%c0_6, %c0_7] : memref<8x1xf32, #tpu.memory_space<vmem>>, vector<8x1xf32>
    tpu.vector_store %arg6[%c0_6, %c0_7], %10 {strides = array<i32>} : memref<8x1xf32, #tpu.memory_space<vmem>>, vector<8x1xf32>,
    %c0_i32_8 = arith.constant 0 : i32
    %12 = arith.cmpi eq, %arg1, %c0_i32_8 : i32
    %13 = arith.extui %12 : i1 to i32
    %c0_i32_9 = arith.constant 0 : i32
    %14 = arith.cmpi ne, %13, %c0_i32_9 : i32
    scf.if %14 {
      %c0_10 = arith.constant 0 : index
      %c0_11 = arith.constant 0 : index
      %15 = vector.load %arg6[%c0_10, %c0_11] : memref<8x1xf32, #tpu.memory_space<vmem>>, vector<8x1xf32>
      %c0_12 = arith.constant 0 : index
      %16 = memref.load %arg4[%c0_12] : memref<1xf32, #tpu.memory_space<smem>>
      %17 = vector.broadcast %16 : f32 to vector<8x1xf32>
      %18 = arith.addf %15, %17 : vector<8x1xf32>
      %c0_13 = arith.constant 0 : index
      %c0_14 = arith.constant 0 : index
      %19 = vector.load %arg5[%c0_13, %c0_14] : memref<8x1xf32, #tpu.memory_space<vmem>>, vector<8x1xf32>
      tpu.vector_store %arg5[%c0_13, %c0_14], %18 {strides = array<i32>} : memref<8x1xf32, #tpu.memory_space<vmem>>, vector<8x1xf32>,
    } else {
    }
    return
  }
  func.func @transform_0(%arg0: i32, %arg1: i32) -> (i32, i32) {
    %c0_i32 = arith.constant 0 : i32
    return %arg0, %arg1 : i32, i32
  }
  func.func @transform_1(%arg0: i32, %arg1: i32) -> (i32, i32) {
    %c0_i32 = arith.constant 0 : i32
    %c0_i32_0 = arith.constant 0 : i32
    return %c0_i32, %arg1 : i32, i32
  }
  func.func @transform_2(%arg0: i32, %arg1: i32) -> i32 {
    %c0_i32 = arith.constant 0 : i32
    %c0_i32_0 = arith.constant 0 : i32
    return %c0_i32 : i32
  }
  func.func @transform_3(%arg0: i32, %arg1: i32) -> (i32, i32) {
    %c0_i32 = arith.constant 0 : i32
    %c0_i32_0 = arith.constant 0 : i32
    return %arg0, %c0_i32 : i32, i32
  }
}

</mosaic_0001>

<llo_original>
// kernel: cnn_forward.1
$region0: #{cnn_forward.1}
  #allocation0 [shape = 'u32[]', space=smem, size = 0x4, offset = 0x4, fixed_abs, tag = 'smem constant byte address 0x4 - core index']
  #allocation1 [shape = 'u32[72,128]{1,0:T(1,128)}', space=vmem, size = 0x9000, scoped, tag = 'internal scratch']
  #allocation2 [shape = 'f32[8,1]{1,0:T(8,128)}', space=vmem, size = 0x1000, scoped, tag = 'scratch operand']
  #allocation3 [shape = 'f32[1]{0:T(128)S(6)}', space=smem, size = 0x200, scoped, tag = 'scoped memory for cnn_forward.1']
  %s0 = inlined_call_operand.vmem [shape: f32[8,256], index: 0, kind: input, shape index: {}]
  %s1 = inlined_call_operand.vmem [shape: f32[1,256], index: 1, kind: input, shape index: {}]
  %s2 = inlined_call_operand.<no memory space> [shape: f32[1], index: 2, kind: input, shape index: {}]
  %s3 = inlined_call_operand.vmem [shape: f32[8,1], index: 3, kind: output, shape index: {}]
  %s4 = sld [smem:[#allocation0]]
  $region30: #{cnn_forward.1} parent=0
    _
  %s6 = ssub.s32 1, %s4
  %s7 = scalar_select 0, %s6, %s4
  %8 = sst [smem:[#allocation3]] %s2
  // Predicated region
  $region2: #{cnn_forward.1} parent=0 // pred_check
    _
  $region3: #{cnn_forward.1} parent=0 // pred_check_branch
    %10 = sbr.rel (0) target = $region5
  $region4: #{cnn_forward.1} parent=0 // pred_region
    _
  $region5: #{cnn_forward.1} parent=0 // pred_fallthru
    _
  // Predicated region
  $region6: #{cnn_forward.1} parent=0 // pred_check
    _
  $region7: #{cnn_forward.1} parent=0 // pred_check_branch
    %12 = sbr.rel (0) target = $region9
  $region8: #{cnn_forward.1} parent=0 // pred_region
    _
  $region9: #{cnn_forward.1} parent=0 // pred_fallthru
    _
  // Predicated region
  $region10: #{cnn_forward.1} parent=0 // pred_check
    _
  $region11: #{cnn_forward.1} parent=0 // pred_check_branch
    %14 = sbr.rel (0) target = $region13
  $region12: #{cnn_forward.1} parent=0 // pred_region
    _
  $region13: #{cnn_forward.1} parent=0 // pred_fallthru
    _
  %p15 = scmp.eq.s32.totalorder 0, 0
  // Predicated region
  $region14: #{cnn_forward.1} parent=0 // pred_check
    %p16 = pneg %p15
  $region15: #{cnn_forward.1} parent=0 // pred_check_branch
    %18 = sbr.rel (%p16) target = $region17
  $region16: #{cnn_forward.1} parent=0 // pred_region
    %vm19 = vcmask 7168
    %20 = vst.msk [vmem:[#allocation2] sm:$0xff] %vm19, 0.0
  $region17: #{cnn_forward.1} parent=0 // pred_fallthru
    _
  %v21 = vld [vmem:[%s0] sm:$0xff]
  %v22 = vld [vmem:[%s0 + $0x8] sm:$0xff]
  %v23 = vld [vmem:[%s1] sm:$0x3]
  %v24 = vld [vmem:[#allocation2] sm:$0xff]
  %v26 = vperm.slane %v23, 0
  %v27 = vperm.slane %v23, 1
  %v30 = vmul.f32 %v21, %v26
  %v31 = vmul.f32 %v22, %v27
  %v32 = vadd.f32 %v30, %v31
  %33 = vadd.xlane.f32.xlu0 %v32
  %v34 = vpop.xlane.xlu0 %33
  %v35 = vadd.f32 %v24, %v34
  %vm36 = vcmask 7168
  %37 = vst.msk [vmem:[#allocation2] sm:$0xff] %vm36, %v35
  // Predicated region
  $region18: #{cnn_forward.1} parent=0 // pred_check
    %p38 = pneg %p15
  $region19: #{cnn_forward.1} parent=0 // pred_check_branch
    %40 = sbr.rel (%p38) target = $region21
  $region20: #{cnn_forward.1} parent=0 // pred_region
    %v41 = vld [vmem:[#allocation2] sm:$0xff]
    %s42 = sld [smem:[#allocation3]]
    %v43 = vstv %s42
    %v44 = vadd.f32 %v41, %v43
    %45 = vst.msk [vmem:[%s3] sm:$0xff] %vm36, %v44
  $region21: #{cnn_forward.1} parent=0 // pred_fallthru
    _
  // Predicated region
  $region22: #{cnn_forward.1} parent=0 // pred_check
    _
  $region23: #{cnn_forward.1} parent=0 // pred_check_branch
    %47 = sbr.rel (0) target = $region25
  $region24: #{cnn_forward.1} parent=0 // pred_region
    _
  $region25: #{cnn_forward.1} parent=0 // pred_fallthru
    _
  // Predicated region
  $region26: #{cnn_forward.1} parent=0 // pred_check
    _
  $region27: #{cnn_forward.1} parent=0 // pred_check_branch
    %49 = sbr.rel (0) target = $region29
  $region28: #{cnn_forward.1} parent=0 // pred_region
    _
  $region29: #{cnn_forward.1} parent=0 // pred_fallthru
    _

</llo_original>
